<compile_context>
chip_gen: v7x
topology: tpu7x:2x2x1
jax: 0.10.0
libtpu: 0.0.40
codegen_flags: <defaults>
</compile_context>

<pallas_src>
import functools

import jax
import jax.numpy as jnp
from jax.experimental import pallas as pl
from jax.experimental.pallas import tpu as pltpu

_LANE = 128
# Minimum sublane multiple for the second-minor block dim, per I/O itemsize.
_SUBLANES = {1: 32, 2: 16, 4: 8, 8: 8}


def _cdiv(a, b):
    return -(-a // b)


def _round_up(n, m):
    return _cdiv(n, m) * m


def _vmem_budget_bytes():
    # ~75% of per-core VMEM: ~48 MiB on v7x (64 MiB), ~96 MiB on v5e/v6e
    # (128 MiB).  Fall back to the v7x number (safe everywhere) if the query
    # is unavailable.
    try:
        cap = int(pltpu.get_tpu_info().vmem_capacity_bytes)
    except Exception:
        cap = 64 << 20
    return (cap * 3) // 4


def _chip_has_bf16_vpu():
    # v5e lacks bf16 VALU/EUP; v6e/v7x have them.  Best-effort query; a wrong
    # guess only affects performance, never results.
    try:
        info = pltpu.get_tpu_info()
        tag = str(getattr(info, "chip_version", info)).lower()
        return ("v5e" not in tag) and ("v5lite" not in tag) and ("v5 lite" not in tag)
    except Exception:
        return True


def _bytes_per_row(features_p, itemsize):
    # Double-buffered input + output block at the I/O dtype plus ~2 f32
    # working slabs inside the body (the cast/d/y chain largely fuses).
    return features_p * (4 * itemsize + 2 * 4)


def _pick_row_tile(rows, features_p, itemsize, sublane, vmem_budget,
                   target_bytes_per_step=8 << 20):
    # LayerNorm is a pure HBM stream: size each grid step to move >= ~8 MiB of
    # (input + output) so the ~0.35 us per-step pipeline overhead is noise.
    io_per_row = 2 * features_p * itemsize
    target_rows = _cdiv(target_bytes_per_step, max(1, io_per_row))
    vmem_rows = max(sublane, vmem_budget // max(1, _bytes_per_row(features_p, itemsize)))
    t = min(target_rows, vmem_rows)
    # Keep >= 2 grid steps when the data allows it so the "parallel" grid axis
    # can shard across v7x's two TensorCores (no-op on 1-TC v5e/v6e).
    if rows > sublane:
        t = min(t, _round_up(_cdiv(rows, 2), sublane))
    t = min(t, _round_up(rows, sublane))          # never tile past the data
    return int(max(sublane, (t // sublane) * sublane))


def _layernorm_kernel(x_ref, a_ref, b_ref, o_ref, *, eps, features, n_pad):
    # x_ref: (row_tile, features_p) block; a_ref/b_ref: (1, features_p),
    # pre-cast to the epilogue dtype and resident across the grid (constant
    # index_map -> no per-step re-DMA).
    x = x_ref[...].astype(jnp.float32)

    # Mean / unbiased variance (torch.std default, ddof=1) in f32.  Padded
    # feature columns (if any) hold zeros: they vanish from sum(x) and add
    # exactly n_pad * mean^2 to sum(d*d), which is subtracted below.
    mean = jnp.sum(x, axis=-1, keepdims=True) * jnp.float32(1.0 / features)
    d = x - mean
    sq = jnp.sum(d * d, axis=-1, keepdims=True)
    if n_pad:
        sq = sq - jnp.float32(n_pad) * (mean * mean)
    # Runtime divide so features == 1 degenerates (inf/nan, like torch)
    # instead of failing at trace time.
    var = sq / jnp.float32(features - 1)

    # eps is added to std (not var), matching the reference module.  The
    # reciprocal is column-shaped ((row_tile, 1)) so it is off the full-tile
    # VALU path; exact math (no approx reciprocal) keeps parity with torch.
    inv = jnp.float32(1.0) / (jnp.sqrt(var) + jnp.float32(eps))

    cd = a_ref.dtype  # epilogue dtype: f32, or bf16 on bf16-VPU chips
    y = a_ref[...] * (d.astype(cd) * inv.astype(cd)) + b_ref[...]
    o_ref[...] = y.astype(o_ref.dtype)


def layer_norm(x, a_2, b_2, *, eps=1e-6, row_tile=None):
    """a_2 * (x - mean) / (std + eps) + b_2 over the last axis.

    x: (..., features); a_2, b_2: (features,). Returns same shape/dtype as x.
    """
    features = x.shape[-1]
    orig_shape = x.shape
    x2 = x.reshape(-1, features)
    rows = x2.shape[0]

    itemsize = jnp.dtype(x.dtype).itemsize
    sublane = _SUBLANES.get(itemsize, 8)

    # Lane-dense feature axis: pad to a 128 multiple when needed (masked
    # partial stores are the largest out_spec penalty); the kernel corrects
    # the statistics for the zero columns and they are sliced off below.
    # No-op for the usual 128-multiple hidden sizes.
    features_p = _round_up(features, _LANE)
    n_pad = features_p - features
    if n_pad:
        x2 = jnp.pad(x2, ((0, 0), (0, n_pad)))

    # Epilogue dtype: bf16 on bf16-VPU chips for bf16 I/O, else f32 (v5e, or
    # f32 I/O).  Reductions always stay f32 inside the kernel.
    compute_dtype = (jnp.bfloat16
                     if (jnp.dtype(x.dtype) == jnp.dtype(jnp.bfloat16)
                         and _chip_has_bf16_vpu())
                     else jnp.float32)
    a2d = a_2.reshape(1, features).astype(compute_dtype)
    b2d = b_2.reshape(1, features).astype(compute_dtype)
    if n_pad:
        a2d = jnp.pad(a2d, ((0, 0), (0, n_pad)))
        b2d = jnp.pad(b2d, ((0, 0), (0, n_pad)))

    budget = _vmem_budget_bytes()
    if row_tile is None:
        row_tile = _pick_row_tile(rows, features_p, itemsize, sublane, budget)
    else:
        row_tile = max(sublane, (int(row_tile) // sublane) * sublane)
        # Clamp a user-supplied tile to the per-core VMEM budget so v7x's
        # 64 MiB parts cannot hit a compile-time VMEM failure.
        cap = max(sublane,
                  ((budget // max(1, _bytes_per_row(features_p, itemsize)))
                   // sublane) * sublane)
        row_tile = min(row_tile, cap)

    # Ragged last block: rows are independent, OOB reads are padding and OOB
    # writes are discarded, so no wrapper-side row pad / output slice needed.
    num_row_tiles = _cdiv(rows, row_tile)

    vmem_need = row_tile * _bytes_per_row(features_p, itemsize) + (4 << 20)
    vmem_limit = int(min(budget, max(32 << 20, 2 * vmem_need)))

    kernel = functools.partial(_layernorm_kernel, eps=eps,
                               features=features, n_pad=n_pad)

    cost = pl.CostEstimate(
        flops=7 * rows * features,
        transcendentals=2 * rows,               # sqrt + reciprocal per row
        bytes_accessed=2 * rows * features_p * itemsize + 2 * features_p * 4,
    )

    out = pl.pallas_call(
        kernel,
        out_shape=jax.ShapeDtypeStruct((rows, features_p), x.dtype),
        grid_spec=pltpu.PrefetchScalarGridSpec(
            num_scalar_prefetch=0,
            grid=(num_row_tiles,),
            in_specs=[
                pl.BlockSpec((row_tile, features_p), lambda i: (i, 0)),
                pl.BlockSpec((1, features_p), lambda i: (0, 0)),
                pl.BlockSpec((1, features_p), lambda i: (0, 0)),
            ],
            out_specs=pl.BlockSpec((row_tile, features_p), lambda i: (i, 0)),
        ),
        compiler_params=pltpu.CompilerParams(
            dimension_semantics=("parallel",),
            vmem_limit_bytes=vmem_limit,
        ),
        cost_estimate=cost,
    )(x2, a2d, b2d)

    if n_pad:
        out = out[:, :features]
    return out.reshape(orig_shape)


def _reference_layer_norm(x, a_2, b_2, eps=1e-6):
    x32 = x.astype(jnp.float32)
    mean = jnp.mean(x32, axis=-1, keepdims=True)
    d = x32 - mean
    var = jnp.sum(d * d, axis=-1, keepdims=True) / (x.shape[-1] - 1)
    std = jnp.sqrt(var)
    return (a_2 * d / (std + eps) + b_2).astype(x.dtype)


if __name__ == "__main__":
    key = jax.random.PRNGKey(0)

    # Transformer-like small shapes; hidden=128 keeps the streamed slabs
    # lane-dense with no feature padding.
    batch, seq, hidden = 2, 8, 128
    x = jax.random.normal(key, (batch, seq, hidden), dtype=jnp.float32)
    # nn.Parameter(torch.ones(features)) / nn.Parameter(torch.zeros(features)).
    a_2 = jnp.ones((hidden,), dtype=jnp.float32)
    b_2 = jnp.zeros((hidden,), dtype=jnp.float32)

    y = jax.block_until_ready(layer_norm(x, a_2, b_2, eps=1e-6))
    y_ref = _reference_layer_norm(x, a_2, b_2, eps=1e-6)
    assert y.shape == x.shape and y.dtype == x.dtype
    assert jnp.allclose(y, y_ref, atol=1e-4, rtol=1e-4), "mismatch vs reference"

    # Secondary check: non-128-multiple hidden (exercises the lane-padding
    # path) with a ragged last row block and non-trivial gamma/beta.
    b2, s2, h2 = 2, 9, 96
    xb = jax.random.normal(jax.random.PRNGKey(1), (b2, s2, h2), dtype=jnp.float32)
    gb = jax.random.normal(jax.random.PRNGKey(2), (h2,), dtype=jnp.float32)
    bb = jax.random.normal(jax.random.PRNGKey(3), (h2,), dtype=jnp.float32)
    yb = jax.block_until_ready(layer_norm(xb, gb, bb, eps=1e-6))
    yb_ref = _reference_layer_norm(xb, gb, bb, eps=1e-6)
    assert yb.shape == xb.shape and yb.dtype == xb.dtype
    assert jnp.allclose(yb, yb_ref, atol=1e-4, rtol=1e-4), "mismatch (padded path)"

    # Note: features == 1 is degenerate (unbiased std of one sample is
    # nan/inf), exactly as in torch.
    print("KERNEL_OK")
</pallas_src>

<mosaic_0001>
module attributes {stable_mosaic.version = 11 : i64} {
  func.func @_layernorm_kernel(%arg0: i32, %arg1: memref<8x128xf32, #tpu.memory_space<vmem>>, %arg2: memref<1x128xf32, #tpu.memory_space<vmem>>, %arg3: memref<1x128xf32, #tpu.memory_space<vmem>>, %arg4: memref<8x128xf32, #tpu.memory_space<vmem>>) attributes {dimension_semantics = [#tpu.dimension_semantics<parallel>], iteration_bounds = array<i64: 2>, scalar_prefetch = 0 : i64, scratch_operands = 0 : i64, tpu.core_type = #tpu.core_type<tc>, window_params = [{transform_indices = @transform_0, window_bounds = array<i64: 8, 128>}, {pipeline_mode = #tpu.pipeline_mode<synchronous>, transform_indices = @transform_1, window_bounds = array<i64: 1, 128>}, {pipeline_mode = #tpu.pipeline_mode<synchronous>, transform_indices = @transform_2, window_bounds = array<i64: 1, 128>}, {transform_indices = @transform_3, window_bounds = array<i64: 8, 128>}]} {
    %c0 = arith.constant 0 : index
    %c0_0 = arith.constant 0 : index
    %0 = vector.load %arg1[%c0, %c0_0] : memref<8x128xf32, #tpu.memory_space<vmem>>, vector<8x128xf32>
    %cst = arith.constant dense<0.000000e+00> : vector<8xf32>
    %1 = vector.multi_reduction <add>, %0, %cst [1] : vector<8x128xf32> to vector<8xf32>
    %2 = vector.shape_cast %1 : vector<8xf32> to vector<8x1xf32>
    %cst_1 = arith.constant 7.812500e-03 : f32
    %3 = vector.broadcast %cst_1 : f32 to vector<8x1xf32>
    %4 = arith.mulf %2, %3 : vector<8x1xf32>
    %5 = vector.broadcast %4 : vector<8x1xf32> to vector<8x128xf32>
    %6 = arith.subf %0, %5 : vector<8x128xf32>
    %7 = arith.mulf %6, %6 : vector<8x128xf32>
    %cst_2 = arith.constant dense<0.000000e+00> : vector<8xf32>
    %8 = vector.multi_reduction <add>, %7, %cst_2 [1] : vector<8x128xf32> to vector<8xf32>
    %9 = vector.shape_cast %8 : vector<8xf32> to vector<8x1xf32>
    %cst_3 = arith.constant 1.270000e+02 : f32
    %10 = vector.broadcast %cst_3 : f32 to vector<8x1xf32>
    %11 = arith.divf %9, %10 : vector<8x1xf32>
    %12 = math.sqrt %11 : vector<8x1xf32>
    %cst_4 = arith.constant 9.99999997E-7 : f32
    %13 = vector.broadcast %cst_4 : f32 to vector<8x1xf32>
    %14 = arith.addf %12, %13 : vector<8x1xf32>
    %cst_5 = arith.constant 1.000000e+00 : f32
    %15 = vector.broadcast %cst_5 : f32 to vector<8x1xf32>
    %16 = arith.divf %15, %14 : vector<8x1xf32>
    %c0_6 = arith.constant 0 : index
    %c0_7 = arith.constant 0 : index
    %17 = vector.load %arg2[%c0_6, %c0_7] : memref<1x128xf32, #tpu.memory_space<vmem>>, vector<1x128xf32>
    %18 = vector.broadcast %16 : vector<8x1xf32> to vector<8x128xf32>
    %19 = arith.mulf %6, %18 : vector<8x128xf32>
    %20 = vector.broadcast %17 : vector<1x128xf32> to vector<8x128xf32>
    %21 = arith.mulf %20, %19 : vector<8x128xf32>
    %c0_8 = arith.constant 0 : index
    %c0_9 = arith.constant 0 : index
    %22 = vector.load %arg3[%c0_8, %c0_9] : memref<1x128xf32, #tpu.memory_space<vmem>>, vector<1x128xf32>
    %23 = vector.broadcast %22 : vector<1x128xf32> to vector<8x128xf32>
    %24 = arith.addf %21, %23 : vector<8x128xf32>
    %c0_10 = arith.constant 0 : index
    %c0_11 = arith.constant 0 : index
    %25 = vector.load %arg4[%c0_10, %c0_11] : memref<8x128xf32, #tpu.memory_space<vmem>>, vector<8x128xf32>
    tpu.vector_store %arg4[%c0_10, %c0_11], %24 {strides = array<i32>} : memref<8x128xf32, #tpu.memory_space<vmem>>, vector<8x128xf32>,
    return
  }
  func.func @transform_0(%arg0: i32) -> (i32, i32) {
    %c0_i32 = arith.constant 0 : i32
    %c0_i32_0 = arith.constant 0 : i32
    return %arg0, %c0_i32 : i32, i32
  }
  func.func @transform_1(%arg0: i32) -> (i32, i32) {
    %c0_i32 = arith.constant 0 : i32
    %c0_i32_0 = arith.constant 0 : i32
    %c0_i32_1 = arith.constant 0 : i32
    return %c0_i32, %c0_i32_0 : i32, i32
  }
  func.func @transform_2(%arg0: i32) -> (i32, i32) {
    %c0_i32 = arith.constant 0 : i32
    %c0_i32_0 = arith.constant 0 : i32
    %c0_i32_1 = arith.constant 0 : i32
    return %c0_i32, %c0_i32_0 : i32, i32
  }
  func.func @transform_3(%arg0: i32) -> (i32, i32) {
    %c0_i32 = arith.constant 0 : i32
    %c0_i32_0 = arith.constant 0 : i32
    return %arg0, %c0_i32 : i32, i32
  }
}

</mosaic_0001>

<llo_original>
// kernel: tpu_custom_call.1
$region0: #{tpu_custom_call.1}
  #allocation0 [shape = 'u32[]', space=smem, size = 0x4, offset = 0x4, fixed_abs, tag = 'smem constant byte address 0x4 - core index']
  #allocation1 [shape = 'u32[144,128]{1,0:T(1,128)}', space=vmem, size = 0x12000, scoped, tag = 'internal scratch']
  %s0 = inlined_call_operand.hbm [shape: f32[16,128], index: 0, kind: input, shape index: {}]
  %s1 = inlined_call_operand.vmem [shape: f32[1,128], index: 1, kind: input, shape index: {}]
  %s2 = inlined_call_operand.vmem [shape: f32[1,128], index: 2, kind: input, shape index: {}]
  %s3 = inlined_call_operand.hbm [shape: f32[16,128], index: 3, kind: output, shape index: {}]
  %s4 = sld [smem:[#allocation0]]
  $region49: #{tpu_custom_call.1} parent=0
    _
  %s6 = ssub.s32 1, %s4
  %s7 = scalar_select 0, %s6, %s4
  $region1: #{tpu_custom_call.1} parent=0
    #allocation2 [shape = 'u8[8192]{0}', space=vmem, size = 0x2000, scoped, tag = 'input window, operand 0']
    #allocation3 [shape = 's32[2]{0}', space=sflag, size = 0x8, scoped, tag = 'scoped memory for tpu_custom_call.1']
    #allocation4 [shape = 's32[2]{0}', space=sflag, size = 0x8, scoped, tag = 'scoped memory for tpu_custom_call.1']
    #allocation5 [shape = 'u8[8192]{0}', space=vmem, size = 0x2000, scoped, tag = 'output window, operand 0']
    %8 = vsyncpa [#allocation3], 0
    %s9 = scalar_lea.sflag [#allocation3], 1
    %10 = vsyncpa %s9, 0
    %11 = vsyncpa [#allocation4], 0
    %s12 = scalar_lea.sflag [#allocation4], 1
    %13 = vsyncpa %s12, 0
    loop: start=0, step=1, limit=4
    $region2: #{tpu_custom_call.1} parent=1 // loop_pre_header
      _
    $region3: #{tpu_custom_call.1} parent=1 // loop_header
      %s15 = sphi 0, %s19
      %p16 = scmp.ge.s32.totalorder %s15, 4
      %s25 = sphi 0, %s27
      %s28 = sphi 0, %s25
      %s29 = sphi 0, %s28
      %s45 = sphi 0, %s29
      %s49 = sphi 0, %s49
      %s51 = sphi 0, %s49
      %s52 = sphi 0, %s51
      %s66 = sphi 0, %s52
      %s70 = sphi 0, %s70
      %s72 = sphi 0, %s70
      %s73 = sphi 0, %s72
      %s87 = sphi 0, %s73
      %s93 = sphi 0, %s95
      %s96 = sphi 0, %s93
      %s97 = sphi 0, %s96
      %s113 = sphi 0, %s97
    $region4: #{tpu_custom_call.1} parent=1 // loop_header_branch
      %18 = sbr.rel (%p16) target = $region8
    $region5: #{tpu_custom_call.1} parent=1 // loop_body
      %s20 = ssub.s32 %s15, 1
      %s21 = ssub.s32 %s15, 2
      %s22 = sadd.s32 %s15, 1
      %s23 = ssub.s32 %s15, %s22
      %p24 = scmp.eq.s32.totalorder %s23, 0
      %s26 = sadd.s32 %s25, 1
      %s27 = scalar_select %p24, %s25, %s26
      %p30 = pneg %p24
      %p31 = scmp.eq.s32.totalorder %s15, 1
      %p32 = por %p30, %p31
      %p33 = scmp.ne.s32.totalorder %s25, %s28
      %p34 = scmp.eq.s32.totalorder %s15, 0
      %p35 = por %p33, %p34
      %p36 = scmp.ne.s32.totalorder %s25, %s28
      %p37 = scmp.eq.s32.totalorder %s20, 1
      %p38 = por %p36, %p37
      %p39 = scmp.ne.s32.totalorder %s28, %s29
      %p40 = scmp.eq.s32.totalorder %s20, 0
      %p41 = por %p39, %p40
      %p42 = scmp.ne.s32.totalorder %s28, %s29
      %p43 = scmp.eq.s32.totalorder %s21, 1
      %p44 = por %p42, %p43
      %p46 = scmp.ne.s32.totalorder %s29, %s45
      %p47 = scmp.eq.s32.totalorder %s21, 0
      %p48 = por %p46, %p47
      %s50 = sadd.s32 %s49, 1
      %p53 = scmp.eq.s32.totalorder %s15, 1
      %p54 = scmp.ne.s32.totalorder %s49, %s51
      %p55 = scmp.eq.s32.totalorder %s15, 0
      %p56 = por %p54, %p55
      %p57 = scmp.ne.s32.totalorder %s49, %s51
      %p58 = scmp.eq.s32.totalorder %s20, 1
      %p59 = por %p57, %p58
      %p60 = scmp.ne.s32.totalorder %s51, %s52
      %p61 = scmp.eq.s32.totalorder %s20, 0
      %p62 = por %p60, %p61
      %p63 = scmp.ne.s32.totalorder %s51, %s52
      %p64 = scmp.eq.s32.totalorder %s21, 1
      %p65 = por %p63, %p64
      %p67 = scmp.ne.s32.totalorder %s52, %s66
      %p68 = scmp.eq.s32.totalorder %s21, 0
      %p69 = por %p67, %p68
      %s71 = sadd.s32 %s70, 1
      %p74 = scmp.eq.s32.totalorder %s15, 1
      %p75 = scmp.ne.s32.totalorder %s70, %s72
      %p76 = scmp.eq.s32.totalorder %s15, 0
      %p77 = por %p75, %p76
      %p78 = scmp.ne.s32.totalorder %s70, %s72
      %p79 = scmp.eq.s32.totalorder %s20, 1
      %p80 = por %p78, %p79
      %p81 = scmp.ne.s32.totalorder %s72, %s73
      %p82 = scmp.eq.s32.totalorder %s20, 0
      %p83 = por %p81, %p82
      %p84 = scmp.ne.s32.totalorder %s72, %s73
      %p85 = scmp.eq.s32.totalorder %s21, 1
      %p86 = por %p84, %p85
      %p88 = scmp.ne.s32.totalorder %s73, %s87
      %p89 = scmp.eq.s32.totalorder %s21, 0
      %p90 = por %p88, %p89
      %s91 = ssub.s32 %s15, %s22
      %p92 = scmp.eq.s32.totalorder %s91, 0
      %s94 = sadd.s32 %s93, 1
      %s95 = scalar_select %p92, %s93, %s94
      %p98 = pneg %p92
      %p99 = scmp.eq.s32.totalorder %s15, 1
      %p100 = por %p98, %p99
      %p101 = scmp.ne.s32.totalorder %s93, %s96
      %p102 = scmp.eq.s32.totalorder %s15, 0
      %p103 = por %p101, %p102
      %p104 = scmp.ne.s32.totalorder %s93, %s96
      %p105 = scmp.eq.s32.totalorder %s20, 1
      %p106 = por %p104, %p105
      %p107 = scmp.ne.s32.totalorder %s96, %s97
      %p108 = scmp.eq.s32.totalorder %s20, 0
      %p109 = por %p107, %p108
      %p110 = scmp.ne.s32.totalorder %s96, %s97
      %p111 = scmp.eq.s32.totalorder %s21, 1
      %p112 = por %p110, %p111
      %p114 = scmp.ne.s32.totalorder %s97, %s113
      %p115 = scmp.eq.s32.totalorder %s21, 0
      %p116 = por %p114, %p115
      %p117 = scmp.le.s32.totalorder 1, %s15
      %p118 = scmp.lt.s32.totalorder %s15, 3
      %p119 = pnand %p117, %p118
      %p120 = pneg %p119
      // Predicated region
      $region9: #{tpu_custom_call.1} parent=5 // pred_check
        _
      $region10: #{tpu_custom_call.1} parent=5 // pred_check_branch
        %122 = sbr.rel (%p119) target = $region12
      $region11: #{tpu_custom_call.1} parent=5 // pred_region
        %s123 = ssub.s32 %s15, 1
        // Predicated region
        $region13: #{tpu_custom_call.1} parent=11 // pred_check
          %p124 = pneg %p62
        $region14: #{tpu_custom_call.1} parent=11 // pred_check_branch
          %126 = sbr.rel (%p124) target = $region16
        $region15: #{tpu_custom_call.1} parent=11 // pred_region
          _
        $region16: #{tpu_custom_call.1} parent=11 // pred_fallthru
          _
        // Predicated region
        $region17: #{tpu_custom_call.1} parent=11 // pred_check
          %p127 = pneg %p83
        $region18: #{tpu_custom_call.1} parent=11 // pred_check_branch
          %129 = sbr.rel (%p127) target = $region20
        $region19: #{tpu_custom_call.1} parent=11 // pred_region
          _
        $region20: #{tpu_custom_call.1} parent=11 // pred_fallthru
          _
      $region12: #{tpu_custom_call.1} parent=5 // pred_fallthru
        _
      %p130 = scmp.lt.s32.totalorder %s15, 2
      // Predicated region
      $region21: #{tpu_custom_call.1} parent=5 // pred_check
        %p131 = pneg %p130
      $region22: #{tpu_custom_call.1} parent=5 // pred_check_branch
        %133 = sbr.rel (%p131) target = $region24
      $region23: #{tpu_custom_call.1} parent=5 // pred_region
        // Predicated region
        $region25: #{tpu_custom_call.1} parent=23 // pred_check
          %p134 = pneg %p35
        $region26: #{tpu_custom_call.1} parent=23 // pred_check_branch
          %136 = sbr.rel (%p134) target = $region28
        $region27: #{tpu_custom_call.1} parent=23 // pred_region
          %s137 = sand.u32 %s25, 1
          %s138 = scalar_lea.sflag [#allocation3], %s137
          %s139 = sand.u32 %s25, 1
          %s140 = smul.addr %s139, 8
          %s141 = scalar_lea.vmem [#allocation2], %s140
          %s143 = ssub.s32 128, 128
          %144 = vsyncadd %s138, %s143
          %s145 = smul.addr %s15, 128
          %s146 = scalar_lea.hbm %s0, %s145
          %s148 = sshll.u32 %s141, 4
          %s149 = int_to_ptr.vmem [resolvable:$true] %s148
          %151 = dma.hbm_to_vmem [thread:$0]  %s146, 128, %s149, %s138
        $region28: #{tpu_custom_call.1} parent=23 // pred_fallthru
          _
      $region24: #{tpu_custom_call.1} parent=5 // pred_fallthru
        _
      %p152 = scmp.le.s32.totalorder 1, %s15
      %p153 = scmp.lt.s32.totalorder %s15, 3
      %p154 = pnand %p152, %p153
      %p155 = pneg %p154
      // Predicated region
      $region29: #{tpu_custom_call.1} parent=5 // pred_check
        _
      $region30: #{tpu_custom_call.1} parent=5 // pred_check_branch
        %157 = sbr.rel (%p154) target = $region32
      $region31: #{tpu_custom_call.1} parent=5 // pred_region
        %s158 = ssub.s32 %s15, 1
        %s159 = sand.u32 %s28, 1
        %s160 = scalar_lea.sflag [#allocation3], %s159
        %s161 = sand.u32 %s28, 1
        %s162 = smul.addr %s161, 8
        %s163 = scalar_lea.vmem [#allocation2], %s162
        // Predicated region
        $region33: #{tpu_custom_call.1} parent=31 // pred_check
          %p164 = pneg %p41
        $region34: #{tpu_custom_call.1} parent=31 // pred_check_branch
          %166 = sbr.rel (%p164) target = $region36
        $region35: #{tpu_custom_call.1} parent=31 // pred_region
          %167 = dma.done %s160, 128
        $region36: #{tpu_custom_call.1} parent=31 // pred_fallthru
          _
        %s168 = sand.u32 %s28, 1
        %s169 = scalar_lea.sflag [#allocation3], %s168
        %s170 = sand.u32 %s28, 1
        %s171 = smul.addr %s170, 8
        %s172 = scalar_lea.vmem [#allocation2], %s171
        %p173 = pneg %p41
        %p174 = pneg %p38
        %p175 = pneg %p62
        %p176 = pneg %p59
        %p177 = pneg %p83
        %p178 = pneg %p80
        %p179 = pneg %p109
        %p180 = pneg %p106
        %s181 = sand.u32 %s96, 1
        %s182 = scalar_lea.sflag [#allocation4], %s181
        %s183 = sand.u32 %s96, 1
        %s184 = smul.addr %s183, 8
        %s185 = scalar_lea.vmem [#allocation5], %s184
        %v186 = vld [vmem:[%s163] sm:$0xff]
        %187 = vadd.xlane.f32.xlu0 %v186
        %v188 = vpop.xlane.xlu0 %187
        %v189 = vmul.f32 %v188, 0.0078125
        %v190 = vsub.f32 %v186, %v189
        %v191 = vmul.f32 %v190, %v190
        %192 = vadd.xlane.f32.xlu0 %v191
        %v193 = vpop.xlane.xlu0 %192
        %v194 = vrcp.pop 127.0
        %v195 = vmul.f32 %v193, %v194
        %v196 = vrsqrt.pop %v195
        %v197 = vmul.f32 %v195, %v196
        %vm198 = vcmp.eq.f32.partialorder %v195, inf
        %v199 = vsel %vm198, %v195, %v197
        %vm200 = vcmp.eq.f32.partialorder %v195, 0.0
        %v201 = vand.u32 %v195, 2147483648
        %v202 = vsel %vm200, %v201, %v199
        %v203 = vadd.f32 %v202, 1e-06
        %v204 = vrcp.pop %v203
        %v205 = vmul.f32 1.0, %v204
        %v206 = vld [vmem:[%s1] sm:$0x1]
        %v207 = vmul.f32 %v190, %v205
        %v209 = vlaneseq
        %v210 = vshrl.u32 %v209, 7
        %v211 = vsub.s32 0, %v210
        %v212 = vrot.slane %v206, %v211
        %v214 = vmul.f32 %v212, %v207
        %v215 = vld [vmem:[%s2] sm:$0x1]
        %v217 = vlaneseq
        %v218 = vshrl.u32 %v217, 7
        %v219 = vsub.s32 0, %v218
        %v220 = vrot.slane %v215, %v219
        %v222 = vadd.f32 %v214, %v220
        %223 = vst [vmem:[%s185] sm:$0xff] %v222
        %s224 = sand.u32 %s96, 1
        %s225 = scalar_lea.sflag [#allocation4], %s224
        %s226 = sand.u32 %s96, 1
        %s227 = smul.addr %s226, 8
        %s228 = scalar_lea.vmem [#allocation5], %s227
        // Predicated region
        $region37: #{tpu_custom_call.1} parent=31 // pred_check
          %p229 = pneg %p106
        $region38: #{tpu_custom_call.1} parent=31 // pred_check_branch
          %231 = sbr.rel (%p229) target = $region40
        $region39: #{tpu_custom_call.1} parent=31 // pred_region
          %s233 = ssub.s32 128, 128
          %234 = vsyncadd %s225, %s233
          %s235 = smul.addr %s20, 128
          %s236 = scalar_lea.hbm %s3, %s235
          %s238 = sshll.u32 %s228, 4
          %s239 = int_to_ptr.vmem [resolvable:$true] %s238
          %241 = dma.vmem_to_hbm [thread:$0]  %s239, 128, %s236, %s225
        $region40: #{tpu_custom_call.1} parent=31 // pred_fallthru
          _
      $region32: #{tpu_custom_call.1} parent=5 // pred_fallthru
        _
      %p242 = scmp.le.s32.totalorder 2, %s15
      // Predicated region
      $region41: #{tpu_custom_call.1} parent=5 // pred_check
        %p243 = pneg %p242
      $region42: #{tpu_custom_call.1} parent=5 // pred_check_branch
        %245 = sbr.rel (%p243) target = $region44
      $region43: #{tpu_custom_call.1} parent=5 // pred_region
        %s246 = ssub.s32 %s15, 2
        // Predicated region
        $region45: #{tpu_custom_call.1} parent=43 // pred_check
          %p247 = pneg %p112
        $region46: #{tpu_custom_call.1} parent=43 // pred_check_branch
          %249 = sbr.rel (%p247) target = $region48
        $region47: #{tpu_custom_call.1} parent=43 // pred_region
          %s250 = sand.u32 %s97, 1
          %s251 = scalar_lea.sflag [#allocation4], %s250
          %s252 = sand.u32 %s97, 1
          %s253 = smul.addr %s252, 8
          %s254 = scalar_lea.vmem [#allocation5], %s253
          %255 = dma.done %s251, 128
        $region48: #{tpu_custom_call.1} parent=43 // pred_fallthru
          _
      $region44: #{tpu_custom_call.1} parent=5 // pred_fallthru
        _
    $region6: #{tpu_custom_call.1} parent=1 // loop_footer
      %s19 = sadd.s32 1, %s15
    $region7: #{tpu_custom_call.1} parent=1 // loop_footer_branch
      %14 = sbr.rel target = $region3
    $region8: #{tpu_custom_call.1} parent=1 // loop_exit
      _
    %256 = vsyncpa [#allocation3], 1
    %s257 = scalar_lea.sflag [#allocation3], 1
    %258 = vsyncpa %s257, 1
    %259 = vsyncpa [#allocation4], 1
    %s260 = scalar_lea.sflag [#allocation4], 1
    %261 = vsyncpa %s260, 1

</llo_original>
